<compile_context>
chip_gen: v7x
topology: tpu7x:2x2x1
jax: 0.10.0
libtpu: 0.0.40
codegen_flags: <defaults>
</compile_context>

<pallas_src>
import functools

import jax
import jax.numpy as jnp
import numpy as np
from jax.experimental import pallas as pl
from jax.experimental.pallas import tpu as pltpu

EPS = 1e-5
C_PAD = 128  # lane width: activation channel dims are zero-padded to this


def _round_up(x, m):
    return (x + m - 1) // m * m


def _fused_decoder_kernel(*refs, l_outs):
    """Fused forward of the whole DecoderBlockA stack (single grid step).

    refs layout:
      refs[0]              : x       (B, L_buf, C_PAD)   rows/lanes zero-padded
      refs[1 + 3*l + 0]    : W_l     (cin8_l, K_l*C_PAD) tap-concatenated weight
      refs[1 + 3*l + 1]    : gamma_l (1, C_PAD)          zero-padded
      refs[1 + 3*l + 2]    : beta_l  (1, C_PAD)          zero-padded
      refs[-1]             : out     (B, L_buf, C_PAD)
    """
    n_layers = len(l_outs)
    x_ref = refs[0]
    p_refs = refs[1:1 + 3 * n_layers]
    o_ref = refs[1 + 3 * n_layers]

    B, L_buf, C = x_ref.shape
    cur = x_ref[...]                                            # (B, L_buf, C)

    # Row-index iota hoisted once; reused for every layer's row mask.
    row_idx = jax.lax.broadcasted_iota(jnp.int32, (B, L_buf, C), 1)

    for li in range(n_layers):
        w_ref = p_refs[3 * li + 0]
        g_ref = p_refs[3 * li + 1]
        be_ref = p_refs[3 * li + 2]
        L_out = l_outs[li]

        cin8, wide = w_ref.shape
        K = wide // C

        # Zero-extend the compact weight rows to the 128-deep (lane-dense)
        # contraction: one sublane-aligned concat with a constant-zero block.
        w_wide = jnp.concatenate(
            [w_ref[...], jnp.zeros((C - cin8, wide), jnp.float32)], axis=0)

        # --- ConvTranspose1d (stride=1, pad=0): ONE wide MXU matmul for all
        #     K taps, then register-resident shifted adds (XLU sublane rolls).
        x2 = cur.reshape(B * L_buf, C)                          # aligned reshape
        y = jnp.dot(x2, w_wide, preferred_element_type=jnp.float32)
        y = y.reshape(B, L_buf, wide)

        acc = y[:, :, 0:C]                                      # tap k = 0
        for k in range(1, K):                                   # K small & static
            tap = y[:, :, k * C:(k + 1) * C]                    # 128-aligned slice
            # Rows >= L_in of `tap` are zero (pad rows of `cur` are zero), so
            # the circular wrap of the roll only moves zeros.
            acc = acc + pltpu.roll(tap, shift=k, axis=1)
        # (conv bias omitted: training-mode BN mean subtraction cancels it)

        # --- BatchNorm1d, training statistics over the true (B, L_out) rows.
        #     Pad rows of `acc` are exactly zero, so plain sums + division by
        #     the true count give the mean; variance uses the masked two-pass
        #     (centered) form for numerical robustness. ----------------------
        mask = row_idx < L_out
        inv_n = 1.0 / float(B * L_out)
        mean = jnp.sum(acc, axis=(0, 1), keepdims=True) * inv_n    # (1,1,C)
        cen = jnp.where(mask, acc - mean, 0.0)
        var = jnp.sum(cen * cen, axis=(0, 1), keepdims=True) * inv_n
        scale = g_ref[...][None] * jax.lax.rsqrt(var + EPS)        # EUP rsqrt
        shift = be_ref[...][None]

        # --- affine + ReLU, then re-zero pad rows (shift leaks there). -------
        yact = jnp.maximum(cen * scale + shift, 0.0)
        yact = jnp.where(mask, yact, 0.0)

        if li == n_layers - 1:
            o_ref[...] = yact.astype(o_ref.dtype)                  # lane-dense store
        else:
            cur = yact                                             # stays in vregs


def init_decoder_params(key, input_dim, layer_dims, kernel_sizes):
    """PyTorch-like uniform init. Weight stored as (K, Cin, Cout)."""
    params = []
    cin = input_dim
    for cout, K in zip(layer_dims, kernel_sizes):
        key, kw, kb = jax.random.split(key, 3)
        bound = 1.0 / np.sqrt(cin * K)
        w = jax.random.uniform(kw, (K, cin, cout), jnp.float32, -bound, bound)
        b = jax.random.uniform(kb, (cout,), jnp.float32, -bound, bound)
        gamma = jnp.ones((cout,), jnp.float32)
        beta = jnp.zeros((cout,), jnp.float32)
        params.append((w, b, gamma, beta))
        cin = cout
    return params


def pack_decoder_params(params):
    """One-time layout prep, hoisted out of the per-call path.

    Per layer:
      w_small : (round_up(cin,8), K*C_PAD) with w_small[c, k*C_PAD + d] = w[k, c, d]
      gamma   : (1, C_PAD) zero-padded
      beta    : (1, C_PAD) zero-padded
    plus a static meta tuple of (K, cin, cout) per layer.
    """
    packed, meta = [], []
    for (w, _b, gamma, beta) in params:
        K, cin, cout = w.shape
        cin8 = _round_up(cin, 8)
        w_small = jnp.zeros((cin8, K * C_PAD), jnp.float32)
        for k in range(K):
            w_small = w_small.at[:cin, k * C_PAD:k * C_PAD + cout].set(w[k])
        g_pad = jnp.zeros((1, C_PAD), jnp.float32).at[0, :cout].set(gamma)
        be_pad = jnp.zeros((1, C_PAD), jnp.float32).at[0, :cout].set(beta)
        packed.append((w_small, g_pad, be_pad))
        meta.append((K, cin, cout))
    return packed, tuple(meta)


def decoder_block_a(x_ncl, packed, meta):
    """Forward pass. x_ncl: (B, C_in, L_in) like PyTorch -> (B, C_out, L_out)."""
    B, cin0, L0 = x_ncl.shape

    # Static length bookkeeping (stride=1, pad=0 transpose conv).
    l_outs, L = [], L0
    for (K, _cin, _cout) in meta:
        L = L + K - 1
        l_outs.append(L)
    L_final = L
    cout_final = meta[-1][2]
    L_buf = _round_up(L_final, 8)   # one sublane-aligned length for all layers

    # Prologue (tiny XLA ops): NCL -> BLC, zero-pad rows to L_buf and channels
    # to 128 lanes.
    x = jnp.transpose(x_ncl, (0, 2, 1)).astype(jnp.float32)
    x = jnp.pad(x, ((0, 0), (0, L_buf - L0), (0, C_PAD - cin0)))

    flat_inputs = [x]
    in_specs = [pl.BlockSpec((B, L_buf, C_PAD), lambda i: (0, 0, 0))]
    for (w_small, g_pad, be_pad) in packed:
        cin8, wide = w_small.shape
        flat_inputs += [w_small, g_pad, be_pad]
        in_specs += [
            pl.BlockSpec((cin8, wide), lambda i: (0, 0)),
            pl.BlockSpec((1, C_PAD), lambda i: (0, 0)),
            pl.BlockSpec((1, C_PAD), lambda i: (0, 0)),
        ]

    kernel = functools.partial(_fused_decoder_kernel, l_outs=tuple(l_outs))

    out_padded = pl.pallas_call(
        kernel,
        out_shape=jax.ShapeDtypeStruct((B, L_buf, C_PAD), jnp.float32),
        grid_spec=pltpu.PrefetchScalarGridSpec(
            num_scalar_prefetch=0,
            grid=(1,),
            in_specs=in_specs,
            out_specs=pl.BlockSpec((B, L_buf, C_PAD), lambda i: (0, 0, 0)),
        ),
        compiler_params=pltpu.CompilerParams(
            dimension_semantics=("arbitrary",),
            vmem_limit_bytes=32 * 1024 * 1024,
        ),
    )(*flat_inputs)

    # Epilogue: drop row/channel padding, BLC -> NCL.
    return jnp.transpose(out_padded[:, :L_final, :cout_final], (0, 2, 1))


# ---- pure-JAX reference (PyTorch semantics, incl. conv bias) ---------------
def _reference(x_ncl, params):
    x = jnp.transpose(x_ncl, (0, 2, 1)).astype(jnp.float32)
    for (w, b, gamma, beta) in params:
        K, _cin, cout = w.shape
        B, L_in, _ = x.shape
        L_out = L_in + K - 1
        out = jnp.zeros((B, L_out, cout), jnp.float32)
        for k in range(K):
            yk = jnp.einsum("blc,cd->bld", x, w[k])
            out = out + jnp.pad(yk, ((0, 0), (k, K - 1 - k), (0, 0)))
        out = out + b[None, None, :]
        mean = jnp.mean(out, axis=(0, 1), keepdims=True)
        var = jnp.mean((out - mean) ** 2, axis=(0, 1), keepdims=True)
        out = (out - mean) * jax.lax.rsqrt(var + EPS) * gamma[None, None, :] \
            + beta[None, None, :]
        x = jnp.maximum(out, 0.0)
    return jnp.transpose(x, (0, 2, 1))


if __name__ == "__main__":
    key = jax.random.PRNGKey(0)
    k_x, k_p = jax.random.split(key)

    # Small shapes consistent with the module.
    batch = 2
    input_dim = 4
    input_len = 8
    layer_dims = (8, 16)
    kernel_sizes = (3, 5)

    x = jax.random.normal(k_x, (batch, input_dim, input_len), jnp.float32)
    params = init_decoder_params(k_p, input_dim, layer_dims, kernel_sizes)

    # One-time layout prep (outside the per-call jit path).
    packed, meta = pack_decoder_params(params)

    fwd = jax.jit(lambda xx, pp: decoder_block_a(xx, pp, meta))
    out = jax.block_until_ready(fwd(x, packed))

    expected_len = input_len + sum(k - 1 for k in kernel_sizes)   # 14
    assert out.shape == (batch, layer_dims[-1], expected_len), out.shape

    ref = jax.block_until_ready(_reference(x, params))
    np.testing.assert_allclose(np.asarray(out), np.asarray(ref), rtol=1e-4, atol=1e-4)

    print("KERNEL_OK")
</pallas_src>

<mosaic_0001>
module attributes {stable_mosaic.version = 11 : i64} {
  func.func @_fused_decoder_kernel(%arg0: i32, %arg1: memref<2x16x128xf32, #tpu.memory_space<vmem>>, %arg2: memref<8x384xf32, #tpu.memory_space<vmem>>, %arg3: memref<1x128xf32, #tpu.memory_space<vmem>>, %arg4: memref<1x128xf32, #tpu.memory_space<vmem>>, %arg5: memref<8x640xf32, #tpu.memory_space<vmem>>, %arg6: memref<1x128xf32, #tpu.memory_space<vmem>>, %arg7: memref<1x128xf32, #tpu.memory_space<vmem>>, %arg8: memref<2x16x128xf32, #tpu.memory_space<vmem>>) attributes {dimension_semantics = [#tpu.dimension_semantics<arbitrary>], iteration_bounds = array<i64: 1>, scalar_prefetch = 0 : i64, scratch_operands = 0 : i64, tpu.core_type = #tpu.core_type<tc>, window_params = [{pipeline_mode = #tpu.pipeline_mode<synchronous>, transform_indices = @transform_0, window_bounds = array<i64: 2, 16, 128>}, {pipeline_mode = #tpu.pipeline_mode<synchronous>, transform_indices = @transform_1, window_bounds = array<i64: 8, 384>}, {pipeline_mode = #tpu.pipeline_mode<synchronous>, transform_indices = @transform_2, window_bounds = array<i64: 1, 128>}, {pipeline_mode = #tpu.pipeline_mode<synchronous>, transform_indices = @transform_3, window_bounds = array<i64: 1, 128>}, {pipeline_mode = #tpu.pipeline_mode<synchronous>, transform_indices = @transform_4, window_bounds = array<i64: 8, 640>}, {pipeline_mode = #tpu.pipeline_mode<synchronous>, transform_indices = @transform_5, window_bounds = array<i64: 1, 128>}, {pipeline_mode = #tpu.pipeline_mode<synchronous>, transform_indices = @transform_6, window_bounds = array<i64: 1, 128>}, {pipeline_mode = #tpu.pipeline_mode<synchronous>, transform_indices = @transform_7, window_bounds = array<i64: 2, 16, 128>}]} {
    %c0 = arith.constant 0 : index
    %c0_0 = arith.constant 0 : index
    %c0_1 = arith.constant 0 : index
    %0 = vector.load %arg1[%c0, %c0_0, %c0_1] : memref<2x16x128xf32, #tpu.memory_space<vmem>>, vector<2x16x128xf32>
    %1 = tpu.iota {dimensions = array<i32: 1>} : vector<2x16x128xi32>
    %c0_2 = arith.constant 0 : index
    %c0_3 = arith.constant 0 : index
    %2 = vector.load %arg2[%c0_2, %c0_3] : memref<8x384xf32, #tpu.memory_space<vmem>>, vector<8x384xf32>
    %cst = arith.constant 0.000000e+00 : f32
    %3 = vector.broadcast %cst : f32 to vector<120x384xf32>
    %4 = tpu.concatenate %2, %3 in 0 : vector<8x384xf32>, vector<120x384xf32> -> vector<128x384xf32>
    %5 = vector.shape_cast %0 : vector<2x16x128xf32> to vector<32x128xf32>
    %cst_4 = arith.constant dense<0.000000e+00> : vector<32x384xf32>
    %6 = tpu.matmul %5, %4, %cst_4 {dimension_numbers = #tpu.dot_dimension_numbers<[1], [0], [0], [1], [0, 0, 1, 1], [], []>} : vector<32x128xf32>, vector<128x384xf32>, vector<32x384xf32> -> vector<32x384xf32>
    %7 = vector.shape_cast %6 : vector<32x384xf32> to vector<2x16x384xf32>
    %8 = vector.extract_strided_slice %7 {offsets = [0, 0, 0], sizes = [2, 16, 128], strides = [1, 1, 1]} : vector<2x16x384xf32> to vector<2x16x128xf32>
    %9 = vector.extract_strided_slice %7 {offsets = [0, 0, 128], sizes = [2, 16, 128], strides = [1, 1, 1]} : vector<2x16x384xf32> to vector<2x16x128xf32>
    %c1_i32 = arith.constant 1 : i32
    %10 = tpu.dynamic_rotate %9 by %c1_i32 dim 1 : vector<2x16x128xf32>, i32 -> vector<2x16x128xf32>
    %11 = arith.addf %8, %10 : vector<2x16x128xf32>
    %12 = vector.extract_strided_slice %7 {offsets = [0, 0, 256], sizes = [2, 16, 128], strides = [1, 1, 1]} : vector<2x16x384xf32> to vector<2x16x128xf32>
    %c2_i32 = arith.constant 2 : i32
    %13 = tpu.dynamic_rotate %12 by %c2_i32 dim 1 : vector<2x16x128xf32>, i32 -> vector<2x16x128xf32>
    %14 = arith.addf %11, %13 : vector<2x16x128xf32>
    %c10_i32 = arith.constant 10 : i32
    %15 = vector.broadcast %c10_i32 : i32 to vector<2x16x128xi32>
    %16 = arith.cmpi slt, %1, %15 : vector<2x16x128xi32>
    %cst_5 = arith.constant dense<0.000000e+00> : vector<128xf32>
    %17 = vector.multi_reduction <add>, %14, %cst_5 [0, 1] : vector<2x16x128xf32> to vector<128xf32>
    %18 = vector.shape_cast %17 : vector<128xf32> to vector<1x1x128xf32>
    %cst_6 = arith.constant 5.000000e-02 : f32
    %19 = vector.broadcast %cst_6 : f32 to vector<1x1x128xf32>
    %20 = arith.mulf %18, %19 : vector<1x1x128xf32>
    %21 = vector.broadcast %20 : vector<1x1x128xf32> to vector<2x16x128xf32>
    %22 = arith.subf %14, %21 : vector<2x16x128xf32>
    %cst_7 = arith.constant 0.000000e+00 : f32
    %23 = vector.broadcast %cst_7 : f32 to vector<2x16x128xf32>
    %24 = arith.select %16, %22, %23 : vector<2x16x128xi1>, vector<2x16x128xf32>
    %25 = arith.mulf %24, %24 : vector<2x16x128xf32>
    %cst_8 = arith.constant dense<0.000000e+00> : vector<128xf32>
    %26 = vector.multi_reduction <add>, %25, %cst_8 [0, 1] : vector<2x16x128xf32> to vector<128xf32>
    %27 = vector.shape_cast %26 : vector<128xf32> to vector<1x1x128xf32>
    %cst_9 = arith.constant 5.000000e-02 : f32
    %28 = vector.broadcast %cst_9 : f32 to vector<1x1x128xf32>
    %29 = arith.mulf %27, %28 : vector<1x1x128xf32>
    %c0_10 = arith.constant 0 : index
    %c0_11 = arith.constant 0 : index
    %30 = vector.load %arg3[%c0_10, %c0_11] : memref<1x128xf32, #tpu.memory_space<vmem>>, vector<1x128xf32>
    %31 = vector.shape_cast %30 : vector<1x128xf32> to vector<1x1x128xf32>
    %cst_12 = arith.constant 9.99999974E-6 : f32
    %32 = vector.broadcast %cst_12 : f32 to vector<1x1x128xf32>
    %33 = arith.addf %29, %32 : vector<1x1x128xf32>
    %34 = math.rsqrt %33 : vector<1x1x128xf32>
    %35 = arith.mulf %31, %34 : vector<1x1x128xf32>
    %c0_13 = arith.constant 0 : index
    %c0_14 = arith.constant 0 : index
    %36 = vector.load %arg4[%c0_13, %c0_14] : memref<1x128xf32, #tpu.memory_space<vmem>>, vector<1x128xf32>
    %37 = vector.shape_cast %36 : vector<1x128xf32> to vector<1x1x128xf32>
    %38 = vector.broadcast %35 : vector<1x1x128xf32> to vector<2x16x128xf32>
    %39 = arith.mulf %24, %38 : vector<2x16x128xf32>
    %40 = vector.broadcast %37 : vector<1x1x128xf32> to vector<2x16x128xf32>
    %41 = arith.addf %39, %40 : vector<2x16x128xf32>
    %cst_15 = arith.constant 0.000000e+00 : f32
    %42 = vector.broadcast %cst_15 : f32 to vector<2x16x128xf32>
    %43 = arith.maximumf %41, %42 : vector<2x16x128xf32>
    %cst_16 = arith.constant 0.000000e+00 : f32
    %44 = vector.broadcast %cst_16 : f32 to vector<2x16x128xf32>
    %45 = arith.select %16, %43, %44 : vector<2x16x128xi1>, vector<2x16x128xf32>
    %c0_17 = arith.constant 0 : index
    %c0_18 = arith.constant 0 : index
    %46 = vector.load %arg5[%c0_17, %c0_18] : memref<8x640xf32, #tpu.memory_space<vmem>>, vector<8x640xf32>
    %cst_19 = arith.constant 0.000000e+00 : f32
    %47 = vector.broadcast %cst_19 : f32 to vector<120x640xf32>
    %48 = tpu.concatenate %46, %47 in 0 : vector<8x640xf32>, vector<120x640xf32> -> vector<128x640xf32>
    %49 = vector.shape_cast %45 : vector<2x16x128xf32> to vector<32x128xf32>
    %cst_20 = arith.constant dense<0.000000e+00> : vector<32x640xf32>
    %50 = tpu.matmul %49, %48, %cst_20 {dimension_numbers = #tpu.dot_dimension_numbers<[1], [0], [0], [1], [0, 0, 1, 1], [], []>} : vector<32x128xf32>, vector<128x640xf32>, vector<32x640xf32> -> vector<32x640xf32>
    %51 = vector.shape_cast %50 : vector<32x640xf32> to vector<2x16x640xf32>
    %52 = vector.extract_strided_slice %51 {offsets = [0, 0, 0], sizes = [2, 16, 128], strides = [1, 1, 1]} : vector<2x16x640xf32> to vector<2x16x128xf32>
    %53 = vector.extract_strided_slice %51 {offsets = [0, 0, 128], sizes = [2, 16, 128], strides = [1, 1, 1]} : vector<2x16x640xf32> to vector<2x16x128xf32>
    %c1_i32_21 = arith.constant 1 : i32
    %54 = tpu.dynamic_rotate %53 by %c1_i32_21 dim 1 : vector<2x16x128xf32>, i32 -> vector<2x16x128xf32>
    %55 = arith.addf %52, %54 : vector<2x16x128xf32>
    %56 = vector.extract_strided_slice %51 {offsets = [0, 0, 256], sizes = [2, 16, 128], strides = [1, 1, 1]} : vector<2x16x640xf32> to vector<2x16x128xf32>
    %c2_i32_22 = arith.constant 2 : i32
    %57 = tpu.dynamic_rotate %56 by %c2_i32_22 dim 1 : vector<2x16x128xf32>, i32 -> vector<2x16x128xf32>
    %58 = arith.addf %55, %57 : vector<2x16x128xf32>
    %59 = vector.extract_strided_slice %51 {offsets = [0, 0, 384], sizes = [2, 16, 128], strides = [1, 1, 1]} : vector<2x16x640xf32> to vector<2x16x128xf32>
    %c3_i32 = arith.constant 3 : i32
    %60 = tpu.dynamic_rotate %59 by %c3_i32 dim 1 : vector<2x16x128xf32>, i32 -> vector<2x16x128xf32>
    %61 = arith.addf %58, %60 : vector<2x16x128xf32>
    %62 = vector.extract_strided_slice %51 {offsets = [0, 0, 512], sizes = [2, 16, 128], strides = [1, 1, 1]} : vector<2x16x640xf32> to vector<2x16x128xf32>
    %c4_i32 = arith.constant 4 : i32
    %63 = tpu.dynamic_rotate %62 by %c4_i32 dim 1 : vector<2x16x128xf32>, i32 -> vector<2x16x128xf32>
    %64 = arith.addf %61, %63 : vector<2x16x128xf32>
    %c14_i32 = arith.constant 14 : i32
    %65 = vector.broadcast %c14_i32 : i32 to vector<2x16x128xi32>
    %66 = arith.cmpi slt, %1, %65 : vector<2x16x128xi32>
    %cst_23 = arith.constant dense<0.000000e+00> : vector<128xf32>
    %67 = vector.multi_reduction <add>, %64, %cst_23 [0, 1] : vector<2x16x128xf32> to vector<128xf32>
    %68 = vector.shape_cast %67 : vector<128xf32> to vector<1x1x128xf32>
    %cst_24 = arith.constant 0.0357142873 : f32
    %69 = vector.broadcast %cst_24 : f32 to vector<1x1x128xf32>
    %70 = arith.mulf %68, %69 : vector<1x1x128xf32>
    %71 = vector.broadcast %70 : vector<1x1x128xf32> to vector<2x16x128xf32>
    %72 = arith.subf %64, %71 : vector<2x16x128xf32>
    %cst_25 = arith.constant 0.000000e+00 : f32
    %73 = vector.broadcast %cst_25 : f32 to vector<2x16x128xf32>
    %74 = arith.select %66, %72, %73 : vector<2x16x128xi1>, vector<2x16x128xf32>
    %75 = arith.mulf %74, %74 : vector<2x16x128xf32>
    %cst_26 = arith.constant dense<0.000000e+00> : vector<128xf32>
    %76 = vector.multi_reduction <add>, %75, %cst_26 [0, 1] : vector<2x16x128xf32> to vector<128xf32>
    %77 = vector.shape_cast %76 : vector<128xf32> to vector<1x1x128xf32>
    %cst_27 = arith.constant 0.0357142873 : f32
    %78 = vector.broadcast %cst_27 : f32 to vector<1x1x128xf32>
    %79 = arith.mulf %77, %78 : vector<1x1x128xf32>
    %c0_28 = arith.constant 0 : index
    %c0_29 = arith.constant 0 : index
    %80 = vector.load %arg6[%c0_28, %c0_29] : memref<1x128xf32, #tpu.memory_space<vmem>>, vector<1x128xf32>
    %81 = vector.shape_cast %80 : vector<1x128xf32> to vector<1x1x128xf32>
    %cst_30 = arith.constant 9.99999974E-6 : f32
    %82 = vector.broadcast %cst_30 : f32 to vector<1x1x128xf32>
    %83 = arith.addf %79, %82 : vector<1x1x128xf32>
    %84 = math.rsqrt %83 : vector<1x1x128xf32>
    %85 = arith.mulf %81, %84 : vector<1x1x128xf32>
    %c0_31 = arith.constant 0 : index
    %c0_32 = arith.constant 0 : index
    %86 = vector.load %arg7[%c0_31, %c0_32] : memref<1x128xf32, #tpu.memory_space<vmem>>, vector<1x128xf32>
    %87 = vector.shape_cast %86 : vector<1x128xf32> to vector<1x1x128xf32>
    %88 = vector.broadcast %85 : vector<1x1x128xf32> to vector<2x16x128xf32>
    %89 = arith.mulf %74, %88 : vector<2x16x128xf32>
    %90 = vector.broadcast %87 : vector<1x1x128xf32> to vector<2x16x128xf32>
    %91 = arith.addf %89, %90 : vector<2x16x128xf32>
    %cst_33 = arith.constant 0.000000e+00 : f32
    %92 = vector.broadcast %cst_33 : f32 to vector<2x16x128xf32>
    %93 = arith.maximumf %91, %92 : vector<2x16x128xf32>
    %cst_34 = arith.constant 0.000000e+00 : f32
    %94 = vector.broadcast %cst_34 : f32 to vector<2x16x128xf32>
    %95 = arith.select %66, %93, %94 : vector<2x16x128xi1>, vector<2x16x128xf32>
    %c0_35 = arith.constant 0 : index
    %c0_36 = arith.constant 0 : index
    %c0_37 = arith.constant 0 : index
    %96 = vector.load %arg8[%c0_35, %c0_36, %c0_37] : memref<2x16x128xf32, #tpu.memory_space<vmem>>, vector<2x16x128xf32>
    tpu.vector_store %arg8[%c0_35, %c0_36, %c0_37], %95 {strides = array<i32>} : memref<2x16x128xf32, #tpu.memory_space<vmem>>, vector<2x16x128xf32>,
    return
  }
  func.func @transform_0(%arg0: i32) -> (i32, i32, i32) {
    %c0_i32 = arith.constant 0 : i32
    %c0_i32_0 = arith.constant 0 : i32
    %c0_i32_1 = arith.constant 0 : i32
    %c0_i32_2 = arith.constant 0 : i32
    return %c0_i32, %c0_i32_0, %c0_i32_1 : i32, i32, i32
  }
  func.func @transform_1(%arg0: i32) -> (i32, i32) {
    %c0_i32 = arith.constant 0 : i32
    %c0_i32_0 = arith.constant 0 : i32
    %c0_i32_1 = arith.constant 0 : i32
    return %c0_i32, %c0_i32_0 : i32, i32
  }
  func.func @transform_2(%arg0: i32) -> (i32, i32) {
    %c0_i32 = arith.constant 0 : i32
    %c0_i32_0 = arith.constant 0 : i32
    %c0_i32_1 = arith.constant 0 : i32
    return %c0_i32, %c0_i32_0 : i32, i32
  }
  func.func @transform_3(%arg0: i32) -> (i32, i32) {
    %c0_i32 = arith.constant 0 : i32
    %c0_i32_0 = arith.constant 0 : i32
    %c0_i32_1 = arith.constant 0 : i32
    return %c0_i32, %c0_i32_0 : i32, i32
  }
  func.func @transform_4(%arg0: i32) -> (i32, i32) {
    %c0_i32 = arith.constant 0 : i32
    %c0_i32_0 = arith.constant 0 : i32
    %c0_i32_1 = arith.constant 0 : i32
    return %c0_i32, %c0_i32_0 : i32, i32
  }
  func.func @transform_5(%arg0: i32) -> (i32, i32) {
    %c0_i32 = arith.constant 0 : i32
    %c0_i32_0 = arith.constant 0 : i32
    %c0_i32_1 = arith.constant 0 : i32
    return %c0_i32, %c0_i32_0 : i32, i32
  }
  func.func @transform_6(%arg0: i32) -> (i32, i32) {
    %c0_i32 = arith.constant 0 : i32
    %c0_i32_0 = arith.constant 0 : i32
    %c0_i32_1 = arith.constant 0 : i32
    return %c0_i32, %c0_i32_0 : i32, i32
  }
  func.func @transform_7(%arg0: i32) -> (i32, i32, i32) {
    %c0_i32 = arith.constant 0 : i32
    %c0_i32_0 = arith.constant 0 : i32
    %c0_i32_1 = arith.constant 0 : i32
    %c0_i32_2 = arith.constant 0 : i32
    return %c0_i32, %c0_i32_0, %c0_i32_1 : i32, i32, i32
  }
}

</mosaic_0001>

<llo_original>
// kernel: _lambda_.1
$region0: #{_lambda_.1}
  #allocation0 [shape = 'u32[]', space=smem, size = 0x4, offset = 0x4, fixed_abs, tag = 'smem constant byte address 0x4 - core index']
  #allocation1 [shape = 'u32[144,128]{1,0:T(1,128)}', space=vmem, size = 0x12000, scoped, tag = 'internal scratch']
  %s0 = inlined_call_operand.vmem [shape: f32[2,16,128], index: 0, kind: input, shape index: {}]
  %s1 = inlined_call_operand.vmem [shape: f32[8,384], index: 1, kind: input, shape index: {}]
  %s2 = inlined_call_operand.vmem [shape: f32[1,128], index: 2, kind: input, shape index: {}]
  %s3 = inlined_call_operand.vmem [shape: f32[1,128], index: 3, kind: input, shape index: {}]
  %s4 = inlined_call_operand.vmem [shape: f32[8,640], index: 4, kind: input, shape index: {}]
  %s5 = inlined_call_operand.vmem [shape: f32[1,128], index: 5, kind: input, shape index: {}]
  %s6 = inlined_call_operand.vmem [shape: f32[1,128], index: 6, kind: input, shape index: {}]
  %s7 = inlined_call_operand.vmem [shape: f32[2,16,128], index: 7, kind: output, shape index: {}]
  %s8 = sld [smem:[#allocation0]]
  $region38: #{_lambda_.1} parent=0
    _
  %s10 = ssub.s32 1, %s8
  %s11 = scalar_select 0, %s10, %s8
  // Predicated region
  $region2: #{_lambda_.1} parent=0 // pred_check
    _
  $region3: #{_lambda_.1} parent=0 // pred_check_branch
    %13 = sbr.rel (0) target = $region5
  $region4: #{_lambda_.1} parent=0 // pred_region
    _
  $region5: #{_lambda_.1} parent=0 // pred_fallthru
    _
  // Predicated region
  $region6: #{_lambda_.1} parent=0 // pred_check
    _
  $region7: #{_lambda_.1} parent=0 // pred_check_branch
    %15 = sbr.rel (0) target = $region9
  $region8: #{_lambda_.1} parent=0 // pred_region
    _
  $region9: #{_lambda_.1} parent=0 // pred_fallthru
    _
  // Predicated region
  $region10: #{_lambda_.1} parent=0 // pred_check
    _
  $region11: #{_lambda_.1} parent=0 // pred_check_branch
    %17 = sbr.rel (0) target = $region13
  $region12: #{_lambda_.1} parent=0 // pred_region
    _
  $region13: #{_lambda_.1} parent=0 // pred_fallthru
    _
  // Predicated region
  $region14: #{_lambda_.1} parent=0 // pred_check
    _
  $region15: #{_lambda_.1} parent=0 // pred_check_branch
    %19 = sbr.rel (0) target = $region17
  $region16: #{_lambda_.1} parent=0 // pred_region
    _
  $region17: #{_lambda_.1} parent=0 // pred_fallthru
    _
  // Predicated region
  $region18: #{_lambda_.1} parent=0 // pred_check
    _
  $region19: #{_lambda_.1} parent=0 // pred_check_branch
    %21 = sbr.rel (0) target = $region21
  $region20: #{_lambda_.1} parent=0 // pred_region
    _
  $region21: #{_lambda_.1} parent=0 // pred_fallthru
    _
  // Predicated region
  $region22: #{_lambda_.1} parent=0 // pred_check
    _
  $region23: #{_lambda_.1} parent=0 // pred_check_branch
    %23 = sbr.rel (0) target = $region25
  $region24: #{_lambda_.1} parent=0 // pred_region
    _
  $region25: #{_lambda_.1} parent=0 // pred_fallthru
    _
  // Predicated region
  $region26: #{_lambda_.1} parent=0 // pred_check
    _
  $region27: #{_lambda_.1} parent=0 // pred_check_branch
    %25 = sbr.rel (0) target = $region29
  $region28: #{_lambda_.1} parent=0 // pred_region
    _
  $region29: #{_lambda_.1} parent=0 // pred_fallthru
    _
  %v26 = vld [vmem:[%s0] sm:$0xff]
  %v27 = vld [vmem:[%s0 + $0x8] sm:$0xff]
  %v28 = vld [vmem:[%s0 + $0x10] sm:$0xff]
  %v29 = vld [vmem:[%s0 + $0x18] sm:$0xff]
  %v30 = vlaneseq
  %v31 = vshrl.u32 %v30, 7
  %v32 = vadd.s32 %v31, 8
  %v33 = vld [vmem:[%s1] sm:$0xff]
  %v34 = vld [vmem:[%s1 + $0x8] sm:$0xff]
  %v35 = vld [vmem:[%s1 + $0x10] sm:$0xff]
  %36 = vmatprep.subr.mxu0 %v34
  %37 = vmatpush1.msra.mxu0 %v33
  %38 = vmatprep.subr.mxu0 0.0
  %39 = vmatpush1.msra.mxu0 0.0
  %40 = vmatprep.subr.mxu0 0.0
  %41 = vmatpush1.msra.mxu0 0.0
  %42 = vmatprep.subr.mxu0 0.0
  %43 = vmatpush1.msra.mxu0 0.0
  %44 = vmatprep.subr.mxu0 0.0
  %45 = vmatpush1.msra.mxu0 0.0
  %46 = vmatprep.subr.mxu0 0.0
  %47 = vmatpush1.msra.mxu0 0.0
  %48 = vmatprep.subr.mxu0 0.0
  %49 = vmatpush1.msra.mxu0 0.0
  %50 = vmatprep.subr.mxu0 0.0
  %51 = vmatpush1.msra.mxu0 0.0
  %52 = vmatprep.subr.mxu0 0.0
  %53 = vmatpush1.msra.mxu0 0.0
  %54 = vmatprep.subr.mxu0 0.0
  %55 = vmatpush1.msra.mxu0 0.0
  %56 = vmatprep.subr.mxu0 0.0
  %57 = vmatpush1.msra.mxu0 0.0
  %58 = vmatprep.subr.mxu0 0.0
  %59 = vmatpush1.msra.mxu0 0.0
  %60 = vmatprep.subr.mxu0 0.0
  %61 = vmatpush1.msra.mxu0 0.0
  %62 = vmatprep.subr.mxu0 0.0
  %63 = vmatpush1.msra.mxu0 0.0
  %64 = vmatprep.subr.mxu0 0.0
  %65 = vmatpush1.msra.mxu0 0.0
  %66 = vmatprep.subr.mxu0 0.0
  %67 = vmatpush1.msra.mxu0 0.0
  %68 = vmatprep.subr.mxu0 0.0
  %69 = vmatpush1.msra.mxu0 0.0
  %70 = vmatprep.subr.mxu0 0.0
  %71 = vmatpush1.msra.mxu0 0.0
  %72 = vmatprep.subr.mxu0 0.0
  %73 = vmatpush1.msra.mxu0 0.0
  %74 = vmatprep.subr.mxu0 0.0
  %75 = vmatpush1.msra.mxu0 0.0
  %76 = vmatprep.subr.mxu0 0.0
  %77 = vmatpush1.msra.mxu0 0.0
  %78 = vmatprep.subr.mxu0 0.0
  %79 = vmatpush1.msra.mxu0 0.0
  %80 = vmatprep.subr.mxu0 0.0
  %81 = vmatpush1.msra.mxu0 0.0
  %82 = vmatprep.subr.mxu0 0.0
  %83 = vmatpush1.msra.mxu0 0.0
  %84 = vmatprep.subr.mxu0 0.0
  %85 = vmatpush1.msra.mxu0 0.0
  %86 = vmatprep.subr.mxu0 0.0
  %87 = vmatpush1.msra.mxu0 0.0
  %88 = vmatprep.subr.mxu0 0.0
  %89 = vmatpush1.msra.mxu0 0.0
  %90 = vmatprep.subr.mxu0 0.0
  %91 = vmatpush1.msra.mxu0 0.0
  %92 = vmatprep.subr.mxu0 0.0
  %93 = vmatpush1.msra.mxu0 0.0
  %94 = vmatprep.subr.mxu0 0.0
  %95 = vmatpush1.msra.mxu0 0.0
  %96 = vmatprep.subr.mxu0 0.0
  %97 = vmatpush1.msra.mxu0 0.0
  %98 = vmatprep.subr.mxu0 0.0
  %99 = vmatpush1.msra.mxu0 0.0
  %100 = vmatprep.mubr.f32.mxu0 0.0
  %101 = vmatmul.mubr.f32.gmra.mrb[0].mxu0 %v26
  %v102 = vpop.f32.mrb[0].mxu0
  %v103 = vadd.f32 0.0, %v102
  %v104 = vpop.f32.mrb[0].mxu0
  %v105 = vadd.f32 0.0, %v104
  %106 = vmatprep.mubr.f32.mxu0 0.0
  %107 = vmatmul.mubr.f32.gmra.mrb[0].mxu0 %v27
  %v108 = vpop.f32.mrb[0].mxu0
  %v109 = vadd.f32 0.0, %v108
  %v110 = vpop.f32.mrb[0].mxu0
  %v111 = vadd.f32 0.0, %v110
  %112 = vmatprep.mubr.f32.mxu0 0.0
  %113 = vmatmul.mubr.f32.gmra.mrb[0].mxu0 %v28
  %v114 = vpop.f32.mrb[0].mxu0
  %v115 = vadd.f32 0.0, %v114
  %v116 = vpop.f32.mrb[0].mxu0
  %v117 = vadd.f32 0.0, %v116
  %118 = vmatprep.mubr.f32.mxu0 0.0
  %119 = vmatmul.mubr.f32.gmra.mrb[0].mxu0 %v29
  %v120 = vpop.f32.mrb[0].mxu0
  %v121 = vadd.f32 0.0, %v120
  %v122 = vpop.f32.mrb[0].mxu0
  %v123 = vadd.f32 0.0, %v122
  %124 = vdwg.mxu0
  %125 = vmatprep.subr.mxu0 0.0
  %126 = vmatpush1.msra.mxu0 %v35
  %127 = vmatprep.subr.mxu0 0.0
  %128 = vmatpush1.msra.mxu0 0.0
  %129 = vmatprep.subr.mxu0 0.0
  %130 = vmatpush1.msra.mxu0 0.0
  %131 = vmatprep.subr.mxu0 0.0
  %132 = vmatpush1.msra.mxu0 0.0
  %133 = vmatprep.subr.mxu0 0.0
  %134 = vmatpush1.msra.mxu0 0.0
  %135 = vmatprep.subr.mxu0 0.0
  %136 = vmatpush1.msra.mxu0 0.0
  %137 = vmatprep.subr.mxu0 0.0
  %138 = vmatpush1.msra.mxu0 0.0
  %139 = vmatprep.subr.mxu0 0.0
  %140 = vmatpush1.msra.mxu0 0.0
  %141 = vmatprep.subr.mxu0 0.0
  %142 = vmatpush1.msra.mxu0 0.0
  %143 = vmatprep.subr.mxu0 0.0
  %144 = vmatpush1.msra.mxu0 0.0
  %145 = vmatprep.subr.mxu0 0.0
  %146 = vmatpush1.msra.mxu0 0.0
  %147 = vmatprep.subr.mxu0 0.0
  %148 = vmatpush1.msra.mxu0 0.0
  %149 = vmatprep.subr.mxu0 0.0
  %150 = vmatpush1.msra.mxu0 0.0
  %151 = vmatprep.subr.mxu0 0.0
  %152 = vmatpush1.msra.mxu0 0.0
  %153 = vmatprep.subr.mxu0 0.0
  %154 = vmatpush1.msra.mxu0 0.0
  %155 = vmatprep.subr.mxu0 0.0
  %156 = vmatpush1.msra.mxu0 0.0
  %157 = vmatprep.subr.mxu0 0.0
  %158 = vmatpush1.msra.mxu0 0.0
  %159 = vmatprep.subr.mxu0 0.0
  %160 = vmatpush1.msra.mxu0 0.0
  %161 = vmatprep.subr.mxu0 0.0
  %162 = vmatpush1.msra.mxu0 0.0
  %163 = vmatprep.subr.mxu0 0.0
  %164 = vmatpush1.msra.mxu0 0.0
  %165 = vmatprep.subr.mxu0 0.0
  %166 = vmatpush1.msra.mxu0 0.0
  %167 = vmatprep.subr.mxu0 0.0
  %168 = vmatpush1.msra.mxu0 0.0
  %169 = vmatprep.subr.mxu0 0.0
  %170 = vmatpush1.msra.mxu0 0.0
  %171 = vmatprep.subr.mxu0 0.0
  %172 = vmatpush1.msra.mxu0 0.0
  %173 = vmatprep.subr.mxu0 0.0
  %174 = vmatpush1.msra.mxu0 0.0
  %175 = vmatprep.subr.mxu0 0.0
  %176 = vmatpush1.msra.mxu0 0.0
  %177 = vmatprep.subr.mxu0 0.0
  %178 = vmatpush1.msra.mxu0 0.0
  %179 = vmatprep.subr.mxu0 0.0
  %180 = vmatpush1.msra.mxu0 0.0
  %181 = vmatprep.subr.mxu0 0.0
  %182 = vmatpush1.msra.mxu0 0.0
  %183 = vmatprep.subr.mxu0 0.0
  %184 = vmatpush1.msra.mxu0 0.0
  %185 = vmatprep.subr.mxu0 0.0
  %186 = vmatpush1.msra.mxu0 0.0
  %187 = vmatprep.subr.mxu0 0.0
  %188 = vmatpush1.msra.mxu0 0.0
  %189 = vmatprep.mubr.f32.mxu0 0.0
  %190 = vmatmul.mubr.f32.gmra.mrb[0].mxu0 %v26
  %v191 = vpop.f32.mrb[0].mxu0
  %v192 = vadd.f32 0.0, %v191
  %v193 = vpop.f32.mrb[0].mxu0
  %194 = vmatprep.mubr.f32.mxu0 0.0
  %195 = vmatmul.mubr.f32.gmra.mrb[0].mxu0 %v27
  %v196 = vpop.f32.mrb[0].mxu0
  %v197 = vadd.f32 0.0, %v196
  %v198 = vpop.f32.mrb[0].mxu0
  %199 = vmatprep.mubr.f32.mxu0 0.0
  %200 = vmatmul.mubr.f32.gmra.mrb[0].mxu0 %v28
  %v201 = vpop.f32.mrb[0].mxu0
  %v202 = vadd.f32 0.0, %v201
  %v203 = vpop.f32.mrb[0].mxu0
  %204 = vmatprep.mubr.f32.mxu0 0.0
  %205 = vmatmul.mubr.f32.gmra.mrb[0].mxu0 %v29
  %v206 = vpop.f32.mrb[0].mxu0
  %v207 = vadd.f32 0.0, %v206
  %v208 = vpop.f32.mrb[0].mxu0
  %209 = vdwg.mxu0
  %v210 = vrot.slane %v105, 7
  %v211 = vrot.slane %v117, 7
  %v212 = vrot.slane %v111, 7
  %v213 = vrot.slane %v123, 7
  %vm214 = vcmp.lt.s32.totalorder %v31, 1
  %v215 = vsel %vm214, %v210, %v212
  %v216 = vsel %vm214, %v211, %v213
  %v217 = vsel %vm214, %v212, %v210
  %v218 = vsel %vm214, %v213, %v211
  %v219 = vadd.f32 %v103, %v217
  %v220 = vadd.f32 %v109, %v215
  %v221 = vadd.f32 %v115, %v218
  %v222 = vadd.f32 %v121, %v216
  %v223 = vrot.slane %v192, 6
  %v224 = vrot.slane %v202, 6
  %v225 = vrot.slane %v197, 6
  %v226 = vrot.slane %v207, 6
  %vm227 = vcmp.lt.s32.totalorder %v31, 2
  %v228 = vsel %vm227, %v223, %v225
  %v229 = vsel %vm227, %v224, %v226
  %v230 = vsel %vm227, %v225, %v223
  %v231 = vsel %vm227, %v226, %v224
  %v232 = vadd.f32 %v219, %v230
  %v233 = vadd.f32 %v220, %v228
  %v234 = vadd.f32 %v221, %v231
  %v235 = vadd.f32 %v222, %v229
  %vm236 = vcmp.lt.s32.totalorder %v31, 10
  %vm237 = vcmp.lt.s32.totalorder %v32, 10
  %v238 = vadd.f32 %v232, %v233
  %v239 = vadd.f32 %v238, %v234
  %v240 = vadd.f32 %v239, %v235
  %v241 = vrot.slane %v240, 4
  %v242 = vadd.f32 %v240, %v241
  %v243 = vrot.slane %v242, 2
  %v244 = vadd.f32 %v242, %v243
  %v245 = vrot.slane %v244, 1
  %v246 = vadd.f32 %v244, %v245
  %v247 = vmul.f32 %v246, 0.05
  %v248 = vsub.f32 %v232, %v247
  %v249 = vsub.f32 %v233, %v247
  %v250 = vsub.f32 %v234, %v247
  %v251 = vsub.f32 %v235, %v247
  %v252 = vsel %vm236, %v248, 0.0
  %v253 = vsel %vm237, %v249, 0.0
  %v254 = vsel %vm236, %v250, 0.0
  %v255 = vsel %vm237, %v251, 0.0
  %v256 = vmul.f32 %v252, %v252
  %v257 = vmul.f32 %v253, %v253
  %v258 = vmul.f32 %v254, %v254
  %v259 = vmul.f32 %v255, %v255
  %v260 = vadd.f32 %v256, %v257
  %v261 = vadd.f32 %v260, %v258
  %v262 = vadd.f32 %v261, %v259
  %v263 = vrot.slane %v262, 4
  %v264 = vadd.f32 %v262, %v263
  %v265 = vrot.slane %v264, 2
  %v266 = vadd.f32 %v264, %v265
  %v267 = vrot.slane %v266, 1
  %v268 = vadd.f32 %v266, %v267
  %v269 = vmul.f32 %v268, 0.05
  %v270 = vld [vmem:[%s2] sm:$0x1]
  %v271 = vadd.f32 %v269, 1e-05
  %v272 = vrsqrt.pop %v271
  %v273 = vmul.f32 %v270, %v272
  %v274 = vld [vmem:[%s3] sm:$0x1]
  %v276 = vlaneseq
  %v277 = vshrl.u32 %v276, 7
  %v278 = vsub.s32 0, %v277
  %v279 = vrot.slane %v273, %v278
  %v281 = vmul.f32 %v252, %v279
  %v282 = vmul.f32 %v253, %v279
  %v283 = vmul.f32 %v254, %v279
  %v284 = vmul.f32 %v255, %v279
  %v286 = vlaneseq
  %v287 = vshrl.u32 %v286, 7
  %v288 = vsub.s32 0, %v287
  %v289 = vrot.slane %v274, %v288
  %v291 = vadd.f32 %v281, %v289
  %v292 = vadd.f32 %v282, %v289
  %v293 = vadd.f32 %v283, %v289
  %v294 = vadd.f32 %v284, %v289
  %v295 = vmax.f32 %v291, 0.0
  %v296 = vmax.f32 %v292, 0.0
  %v297 = vmax.f32 %v293, 0.0
  %v298 = vmax.f32 %v294, 0.0
  %v299 = vsel %vm236, %v295, 0.0
  %v300 = vsel %vm237, %v296, 0.0
  %v301 = vsel %vm236, %v297, 0.0
  %v302 = vsel %vm237, %v298, 0.0
  %v303 = vld [vmem:[%s4] sm:$0xff]
  %v304 = vld [vmem:[%s4 + $0x8] sm:$0xff]
  %v305 = vld [vmem:[%s4 + $0x10] sm:$0xff]
  %v306 = vld [vmem:[%s4 + $0x18] sm:$0xff]
  %v307 = vld [vmem:[%s4 + $0x20] sm:$0xff]
  %308 = vmatprep.subr.mxu0 %v304
  %309 = vmatpush1.msra.mxu0 %v303
  %310 = vmatprep.subr.mxu0 0.0
  %311 = vmatpush1.msra.mxu0 0.0
  %312 = vmatprep.subr.mxu0 0.0
  %313 = vmatpush1.msra.mxu0 0.0
  %314 = vmatprep.subr.mxu0 0.0
  %315 = vmatpush1.msra.mxu0 0.0
  %316 = vmatprep.subr.mxu0 0.0
  %317 = vmatpush1.msra.mxu0 0.0
  %318 = vmatprep.subr.mxu0 0.0
  %319 = vmatpush1.msra.mxu0 0.0
  %320 = vmatprep.subr.mxu0 0.0
  %321 = vmatpush1.msra.mxu0 0.0
  %322 = vmatprep.subr.mxu0 0.0
  %323 = vmatpush1.msra.mxu0 0.0
  %324 = vmatprep.subr.mxu0 0.0
  %325 = vmatpush1.msra.mxu0 0.0
  %326 = vmatprep.subr.mxu0 0.0
  %327 = vmatpush1.msra.mxu0 0.0
  %328 = vmatprep.subr.mxu0 0.0
  %329 = vmatpush1.msra.mxu0 0.0
  %330 = vmatprep.subr.mxu0 0.0
  %331 = vmatpush1.msra.mxu0 0.0
  %332 = vmatprep.subr.mxu0 0.0
  %333 = vmatpush1.msra.mxu0 0.0
  %334 = vmatprep.subr.mxu0 0.0
  %335 = vmatpush1.msra.mxu0 0.0
  %336 = vmatprep.subr.mxu0 0.0
  %337 = vmatpush1.msra.mxu0 0.0
  %338 = vmatprep.subr.mxu0 0.0
  %339 = vmatpush1.msra.mxu0 0.0
  %340 = vmatprep.subr.mxu0 0.0
  %341 = vmatpush1.msra.mxu0 0.0
  %342 = vmatprep.subr.mxu0 0.0
  %343 = vmatpush1.msra.mxu0 0.0
  %344 = vmatprep.subr.mxu0 0.0
  %345 = vmatpush1.msra.mxu0 0.0
  %346 = vmatprep.subr.mxu0 0.0
  %347 = vmatpush1.msra.mxu0 0.0
  %348 = vmatprep.subr.mxu0 0.0
  %349 = vmatpush1.msra.mxu0 0.0
  %350 = vmatprep.subr.mxu0 0.0
  %351 = vmatpush1.msra.mxu0 0.0
  %352 = vmatprep.subr.mxu0 0.0
  %353 = vmatpush1.msra.mxu0 0.0
  %354 = vmatprep.subr.mxu0 0.0
  %355 = vmatpush1.msra.mxu0 0.0
  %356 = vmatprep.subr.mxu0 0.0
  %357 = vmatpush1.msra.mxu0 0.0
  %358 = vmatprep.subr.mxu0 0.0
  %359 = vmatpush1.msra.mxu0 0.0
  %360 = vmatprep.subr.mxu0 0.0
  %361 = vmatpush1.msra.mxu0 0.0
  %362 = vmatprep.subr.mxu0 0.0
  %363 = vmatpush1.msra.mxu0 0.0
  %364 = vmatprep.subr.mxu0 0.0
  %365 = vmatpush1.msra.mxu0 0.0
  %366 = vmatprep.subr.mxu0 0.0
  %367 = vmatpush1.msra.mxu0 0.0
  %368 = vmatprep.subr.mxu0 0.0
  %369 = vmatpush1.msra.mxu0 0.0
  %370 = vmatprep.subr.mxu0 0.0
  %371 = vmatpush1.msra.mxu0 0.0
  %372 = vmatprep.mubr.f32.mxu0 0.0
  %373 = vmatmul.mubr.f32.gmra.mrb[0].mxu0 %v299
  %v374 = vpop.f32.mrb[0].mxu0
  %v375 = vadd.f32 0.0, %v374
  %v376 = vpop.f32.mrb[0].mxu0
  %v377 = vadd.f32 0.0, %v376
  %378 = vmatprep.mubr.f32.mxu0 0.0
  %379 = vmatmul.mubr.f32.gmra.mrb[0].mxu0 %v300
  %v380 = vpop.f32.mrb[0].mxu0
  %v381 = vadd.f32 0.0, %v380
  %v382 = vpop.f32.mrb[0].mxu0
  %v383 = vadd.f32 0.0, %v382
  %384 = vmatprep.mubr.f32.mxu0 0.0
  %385 = vmatmul.mubr.f32.gmra.mrb[0].mxu0 %v301
  %v386 = vpop.f32.mrb[0].mxu0
  %v387 = vadd.f32 0.0, %v386
  %v388 = vpop.f32.mrb[0].mxu0
  %v389 = vadd.f32 0.0, %v388
  %390 = vmatprep.mubr.f32.mxu0 0.0
  %391 = vmatmul.mubr.f32.gmra.mrb[0].mxu0 %v302
  %v392 = vpop.f32.mrb[0].mxu0
  %v393 = vadd.f32 0.0, %v392
  %v394 = vpop.f32.mrb[0].mxu0
  %v395 = vadd.f32 0.0, %v394
  %396 = vdwg.mxu0
  %397 = vmatprep.subr.mxu0 %v306
  %398 = vmatpush1.msra.mxu0 %v305
  %399 = vmatprep.subr.mxu0 0.0
  %400 = vmatpush1.msra.mxu0 0.0
  %401 = vmatprep.subr.mxu0 0.0
  %402 = vmatpush1.msra.mxu0 0.0
  %403 = vmatprep.subr.mxu0 0.0
  %404 = vmatpush1.msra.mxu0 0.0
  %405 = vmatprep.subr.mxu0 0.0
  %406 = vmatpush1.msra.mxu0 0.0
  %407 = vmatprep.subr.mxu0 0.0
  %408 = vmatpush1.msra.mxu0 0.0
  %409 = vmatprep.subr.mxu0 0.0
  %410 = vmatpush1.msra.mxu0 0.0
  %411 = vmatprep.subr.mxu0 0.0
  %412 = vmatpush1.msra.mxu0 0.0
  %413 = vmatprep.subr.mxu0 0.0
  %414 = vmatpush1.msra.mxu0 0.0
  %415 = vmatprep.subr.mxu0 0.0
  %416 = vmatpush1.msra.mxu0 0.0
  %417 = vmatprep.subr.mxu0 0.0
  %418 = vmatpush1.msra.mxu0 0.0
  %419 = vmatprep.subr.mxu0 0.0
  %420 = vmatpush1.msra.mxu0 0.0
  %421 = vmatprep.subr.mxu0 0.0
  %422 = vmatpush1.msra.mxu0 0.0
  %423 = vmatprep.subr.mxu0 0.0
  %424 = vmatpush1.msra.mxu0 0.0
  %425 = vmatprep.subr.mxu0 0.0
  %426 = vmatpush1.msra.mxu0 0.0
  %427 = vmatprep.subr.mxu0 0.0
  %428 = vmatpush1.msra.mxu0 0.0
  %429 = vmatprep.subr.mxu0 0.0
  %430 = vmatpush1.msra.mxu0 0.0
  %431 = vmatprep.subr.mxu0 0.0
  %432 = vmatpush1.msra.mxu0 0.0
  %433 = vmatprep.subr.mxu0 0.0
  %434 = vmatpush1.msra.mxu0 0.0
  %435 = vmatprep.subr.mxu0 0.0
  %436 = vmatpush1.msra.mxu0 0.0
  %437 = vmatprep.subr.mxu0 0.0
  %438 = vmatpush1.msra.mxu0 0.0
  %439 = vmatprep.subr.mxu0 0.0
  %440 = vmatpush1.msra.mxu0 0.0
  %441 = vmatprep.subr.mxu0 0.0
  %442 = vmatpush1.msra.mxu0 0.0
  %443 = vmatprep.subr.mxu0 0.0
  %444 = vmatpush1.msra.mxu0 0.0
  %445 = vmatprep.subr.mxu0 0.0
  %446 = vmatpush1.msra.mxu0 0.0
  %447 = vmatprep.subr.mxu0 0.0
  %448 = vmatpush1.msra.mxu0 0.0
  %449 = vmatprep.subr.mxu0 0.0
  %450 = vmatpush1.msra.mxu0 0.0
  %451 = vmatprep.subr.mxu0 0.0
  %452 = vmatpush1.msra.mxu0 0.0
  %453 = vmatprep.subr.mxu0 0.0
  %454 = vmatpush1.msra.mxu0 0.0
  %455 = vmatprep.subr.mxu0 0.0
  %456 = vmatpush1.msra.mxu0 0.0
  %457 = vmatprep.subr.mxu0 0.0
  %458 = vmatpush1.msra.mxu0 0.0
  %459 = vmatprep.subr.mxu0 0.0
  %460 = vmatpush1.msra.mxu0 0.0
  %461 = vmatprep.mubr.f32.mxu0 0.0
  %462 = vmatmul.mubr.f32.gmra.mrb[0].mxu0 %v299
  %v463 = vpop.f32.mrb[0].mxu0
  %v464 = vadd.f32 0.0, %v463
  %v465 = vpop.f32.mrb[0].mxu0
  %v466 = vadd.f32 0.0, %v465
  %467 = vmatprep.mubr.f32.mxu0 0.0
  %468 = vmatmul.mubr.f32.gmra.mrb[0].mxu0 %v300
  %v469 = vpop.f32.mrb[0].mxu0
  %v470 = vadd.f32 0.0, %v469
  %v471 = vpop.f32.mrb[0].mxu0
  %v472 = vadd.f32 0.0, %v471
  %473 = vmatprep.mubr.f32.mxu0 0.0
  %474 = vmatmul.mubr.f32.gmra.mrb[0].mxu0 %v301
  %v475 = vpop.f32.mrb[0].mxu0
  %v476 = vadd.f32 0.0, %v475
  %v477 = vpop.f32.mrb[0].mxu0
  %v478 = vadd.f32 0.0, %v477
  %479 = vmatprep.mubr.f32.mxu0 0.0
  %480 = vmatmul.mubr.f32.gmra.mrb[0].mxu0 %v302
  %v481 = vpop.f32.mrb[0].mxu0
  %v482 = vadd.f32 0.0, %v481
  %v483 = vpop.f32.mrb[0].mxu0
  %v484 = vadd.f32 0.0, %v483
  %485 = vdwg.mxu0
  %486 = vmatprep.subr.mxu0 0.0
  %487 = vmatpush1.msra.mxu0 %v307
  %488 = vmatprep.subr.mxu0 0.0
  %489 = vmatpush1.msra.mxu0 0.0
  %490 = vmatprep.subr.mxu0 0.0
  %491 = vmatpush1.msra.mxu0 0.0
  %492 = vmatprep.subr.mxu0 0.0
  %493 = vmatpush1.msra.mxu0 0.0
  %494 = vmatprep.subr.mxu0 0.0
  %495 = vmatpush1.msra.mxu0 0.0
  %496 = vmatprep.subr.mxu0 0.0
  %497 = vmatpush1.msra.mxu0 0.0
  %498 = vmatprep.subr.mxu0 0.0
  %499 = vmatpush1.msra.mxu0 0.0
  %500 = vmatprep.subr.mxu0 0.0
  %501 = vmatpush1.msra.mxu0 0.0
  %502 = vmatprep.subr.mxu0 0.0
  %503 = vmatpush1.msra.mxu0 0.0
  %504 = vmatprep.subr.mxu0 0.0
  %505 = vmatpush1.msra.mxu0 0.0
  %506 = vmatprep.subr.mxu0 0.0
  %507 = vmatpush1.msra.mxu0 0.0
  %508 = vmatprep.subr.mxu0 0.0
  %509 = vmatpush1.msra.mxu0 0.0
  %510 = vmatprep.subr.mxu0 0.0
  %511 = vmatpush1.msra.mxu0 0.0
  %512 = vmatprep.subr.mxu0 0.0
  %513 = vmatpush1.msra.mxu0 0.0
  %514 = vmatprep.subr.mxu0 0.0
  %515 = vmatpush1.msra.mxu0 0.0
  %516 = vmatprep.subr.mxu0 0.0
  %517 = vmatpush1.msra.mxu0 0.0
  %518 = vmatprep.subr.mxu0 0.0
  %519 = vmatpush1.msra.mxu0 0.0
  %520 = vmatprep.subr.mxu0 0.0
  %521 = vmatpush1.msra.mxu0 0.0
  %522 = vmatprep.subr.mxu0 0.0
  %523 = vmatpush1.msra.mxu0 0.0
  %524 = vmatprep.subr.mxu0 0.0
  %525 = vmatpush1.msra.mxu0 0.0
  %526 = vmatprep.subr.mxu0 0.0
  %527 = vmatpush1.msra.mxu0 0.0
  %528 = vmatprep.subr.mxu0 0.0
  %529 = vmatpush1.msra.mxu0 0.0
  %530 = vmatprep.subr.mxu0 0.0
  %531 = vmatpush1.msra.mxu0 0.0
  %532 = vmatprep.subr.mxu0 0.0
  %533 = vmatpush1.msra.mxu0 0.0
  %534 = vmatprep.subr.mxu0 0.0
  %535 = vmatpush1.msra.mxu0 0.0
  %536 = vmatprep.subr.mxu0 0.0
  %537 = vmatpush1.msra.mxu0 0.0
  %538 = vmatprep.subr.mxu0 0.0
  %539 = vmatpush1.msra.mxu0 0.0
  %540 = vmatprep.subr.mxu0 0.0
  %541 = vmatpush1.msra.mxu0 0.0
  %542 = vmatprep.subr.mxu0 0.0
  %543 = vmatpush1.msra.mxu0 0.0
  %544 = vmatprep.subr.mxu0 0.0
  %545 = vmatpush1.msra.mxu0 0.0
  %546 = vmatprep.subr.mxu0 0.0
  %547 = vmatpush1.msra.mxu0 0.0
  %548 = vmatprep.subr.mxu0 0.0
  %549 = vmatpush1.msra.mxu0 0.0
  %550 = vmatprep.mubr.f32.mxu0 0.0
  %551 = vmatmul.mubr.f32.gmra.mrb[0].mxu0 %v299
  %v552 = vpop.f32.mrb[0].mxu0
  %v553 = vadd.f32 0.0, %v552
  %v554 = vpop.f32.mrb[0].mxu0
  %555 = vmatprep.mubr.f32.mxu0 0.0
  %556 = vmatmul.mubr.f32.gmra.mrb[0].mxu0 %v300
  %v557 = vpop.f32.mrb[0].mxu0
  %v558 = vadd.f32 0.0, %v557
  %v559 = vpop.f32.mrb[0].mxu0
  %560 = vmatprep.mubr.f32.mxu0 0.0
  %561 = vmatmul.mubr.f32.gmra.mrb[0].mxu0 %v301
  %v562 = vpop.f32.mrb[0].mxu0
  %v563 = vadd.f32 0.0, %v562
  %v564 = vpop.f32.mrb[0].mxu0
  %565 = vmatprep.mubr.f32.mxu0 0.0
  %566 = vmatmul.mubr.f32.gmra.mrb[0].mxu0 %v302
  %v567 = vpop.f32.mrb[0].mxu0
  %v568 = vadd.f32 0.0, %v567
  %v569 = vpop.f32.mrb[0].mxu0
  %570 = vdwg.mxu0
  %v571 = vrot.slane %v377, 7
  %v572 = vrot.slane %v389, 7
  %v573 = vrot.slane %v383, 7
  %v574 = vrot.slane %v395, 7
  %v575 = vsel %vm214, %v571, %v573
  %v576 = vsel %vm214, %v572, %v574
  %v577 = vsel %vm214, %v573, %v571
  %v578 = vsel %vm214, %v574, %v572
  %v579 = vadd.f32 %v375, %v577
  %v580 = vadd.f32 %v381, %v575
  %v581 = vadd.f32 %v387, %v578
  %v582 = vadd.f32 %v393, %v576
  %v583 = vrot.slane %v464, 6
  %v584 = vrot.slane %v476, 6
  %v585 = vrot.slane %v470, 6
  %v586 = vrot.slane %v482, 6
  %v587 = vsel %vm227, %v583, %v585
  %v588 = vsel %vm227, %v584, %v586
  %v589 = vsel %vm227, %v585, %v583
  %v590 = vsel %vm227, %v586, %v584
  %v591 = vadd.f32 %v579, %v589
  %v592 = vadd.f32 %v580, %v587
  %v593 = vadd.f32 %v581, %v590
  %v594 = vadd.f32 %v582, %v588
  %v595 = vrot.slane %v466, 5
  %v596 = vrot.slane %v478, 5
  %v597 = vrot.slane %v472, 5
  %v598 = vrot.slane %v484, 5
  %vm599 = vcmp.lt.s32.totalorder %v31, 3
  %v600 = vsel %vm599, %v595, %v597
  %v601 = vsel %vm599, %v596, %v598
  %v602 = vsel %vm599, %v597, %v595
  %v603 = vsel %vm599, %v598, %v596
  %v604 = vadd.f32 %v591, %v602
  %v605 = vadd.f32 %v592, %v600
  %v606 = vadd.f32 %v593, %v603
  %v607 = vadd.f32 %v594, %v601
  %v608 = vrot.slane %v553, 4
  %v609 = vrot.slane %v563, 4
  %v610 = vrot.slane %v558, 4
  %v611 = vrot.slane %v568, 4
  %vm612 = vcmp.lt.s32.totalorder %v31, 4
  %v613 = vsel %vm612, %v608, %v610
  %v614 = vsel %vm612, %v609, %v611
  %v615 = vsel %vm612, %v610, %v608
  %v616 = vsel %vm612, %v611, %v609
  %v617 = vadd.f32 %v604, %v615
  %v618 = vadd.f32 %v605, %v613
  %v619 = vadd.f32 %v606, %v616
  %v620 = vadd.f32 %v607, %v614
  %vm621 = vcmp.lt.s32.totalorder %v31, 14
  %vm622 = vcmp.lt.s32.totalorder %v32, 14
  %v623 = vadd.f32 %v617, %v618
  %v624 = vadd.f32 %v623, %v619
  %v625 = vadd.f32 %v624, %v620
  %v626 = vrot.slane %v625, 4
  %v627 = vadd.f32 %v625, %v626
  %v628 = vrot.slane %v627, 2
  %v629 = vadd.f32 %v627, %v628
  %v630 = vrot.slane %v629, 1
  %v631 = vadd.f32 %v629, %v630
  %v632 = vmul.f32 %v631, 0.035714287
  %v633 = vsub.f32 %v617, %v632
  %v634 = vsub.f32 %v618, %v632
  %v635 = vsub.f32 %v619, %v632
  %v636 = vsub.f32 %v620, %v632
  %v637 = vsel %vm621, %v633, 0.0
  %v638 = vsel %vm622, %v634, 0.0
  %v639 = vsel %vm621, %v635, 0.0
  %v640 = vsel %vm622, %v636, 0.0
  %v641 = vmul.f32 %v637, %v637
  %v642 = vmul.f32 %v638, %v638
  %v643 = vmul.f32 %v639, %v639
  %v644 = vmul.f32 %v640, %v640
  %v645 = vadd.f32 %v641, %v642
  %v646 = vadd.f32 %v645, %v643
  %v647 = vadd.f32 %v646, %v644
  %v648 = vrot.slane %v647, 4
  %v649 = vadd.f32 %v647, %v648
  %v650 = vrot.slane %v649, 2
  %v651 = vadd.f32 %v649, %v650
  %v652 = vrot.slane %v651, 1
  %v653 = vadd.f32 %v651, %v652
  %v654 = vmul.f32 %v653, 0.035714287
  %v655 = vld [vmem:[%s5] sm:$0x1]
  %v656 = vadd.f32 %v654, 1e-05
  %v657 = vrsqrt.pop %v656
  %v658 = vmul.f32 %v655, %v657
  %v659 = vld [vmem:[%s6] sm:$0x1]
  %v661 = vlaneseq
  %v662 = vshrl.u32 %v661, 7
  %v663 = vsub.s32 0, %v662
  %v664 = vrot.slane %v658, %v663
  %v666 = vmul.f32 %v637, %v664
  %v667 = vmul.f32 %v638, %v664
  %v668 = vmul.f32 %v639, %v664
  %v669 = vmul.f32 %v640, %v664
  %v671 = vlaneseq
  %v672 = vshrl.u32 %v671, 7
  %v673 = vsub.s32 0, %v672
  %v674 = vrot.slane %v659, %v673
  %v676 = vadd.f32 %v666, %v674
  %v677 = vadd.f32 %v667, %v674
  %v678 = vadd.f32 %v668, %v674
  %v679 = vadd.f32 %v669, %v674
  %v680 = vmax.f32 %v676, 0.0
  %v681 = vmax.f32 %v677, 0.0
  %v682 = vmax.f32 %v678, 0.0
  %v683 = vmax.f32 %v679, 0.0
  %v684 = vsel %vm621, %v680, 0.0
  %v685 = vsel %vm622, %v681, 0.0
  %v686 = vsel %vm621, %v682, 0.0
  %v687 = vsel %vm622, %v683, 0.0
  %688 = vst [vmem:[%s7] sm:$0xff] %v684
  %689 = vst [vmem:[%s7 + $0x8] sm:$0xff] %v685
  %690 = vst [vmem:[%s7 + $0x10] sm:$0xff] %v686
  %691 = vst [vmem:[%s7 + $0x18] sm:$0xff] %v687
  // Predicated region
  $region30: #{_lambda_.1} parent=0 // pred_check
    _
  $region31: #{_lambda_.1} parent=0 // pred_check_branch
    %693 = sbr.rel (0) target = $region33
  $region32: #{_lambda_.1} parent=0 // pred_region
    _
  $region33: #{_lambda_.1} parent=0 // pred_fallthru
    _
  // Predicated region
  $region34: #{_lambda_.1} parent=0 // pred_check
    _
  $region35: #{_lambda_.1} parent=0 // pred_check_branch
    %695 = sbr.rel (0) target = $region37
  $region36: #{_lambda_.1} parent=0 // pred_region
    _
  $region37: #{_lambda_.1} parent=0 // pred_fallthru
    _

</llo_original>
